<compile_context>
chip_gen: v7x
topology: tpu7x:2x2x1
jax: 0.10.0
libtpu: 0.0.40
codegen_flags: <defaults>
</compile_context>

<pallas_src>
import functools

import jax
import jax.numpy as jnp
from jax.experimental import pallas as pl
from jax.experimental.pallas import tpu as pltpu


def _round_up(n, m):
    return ((n + m - 1) // m) * m


def _biaffine_kernel(x_ref, yT_ref, u_ref, o_ref, *, compute_dtype):
    # x_ref : (1, Sx_t, D)   bias-augmented, zero-padded x rows (compute_dtype)
    # yT_ref: (1, D, Sy)     bias-augmented, zero-padded y, pre-transposed
    # u_ref : (1, D, D)      U[:, o, :] for the current output channel o
    # o_ref : (1, 1, Sx_t, Sy) f32 output tile (dense (Sx_t, Sy) store)
    x = x_ref[0]                                   # (Sx_t, D)
    yT = yT_ref[0]                                 # (D, Sy)
    u = u_ref[0]                                   # (D, D)

    # First contraction on the MXU: t[x, j] = sum_i x[x, i] * U[i, o, j]
    t = jnp.dot(x, u, preferred_element_type=jnp.float32)          # (Sx_t, D) f32
    # Second contraction: res[x, y] = sum_j t[x, j] * y[y, j]
    res = jnp.dot(t.astype(compute_dtype), yT,
                  preferred_element_type=jnp.float32)               # (Sx_t, Sy) f32

    o_ref[0, 0] = res.astype(o_ref.dtype)


def biaffine_forward(x, y, U, bias_x=True, bias_y=True, *,
                     block_sx=256, compute_dtype=jnp.bfloat16):
    """x: (B, Sx, in), y: (B, Sy, in), U: (in+bias_x, out, in+bias_y).

    Returns (B, Sx, Sy, out) float32 (same semantics as the PyTorch module).
    """
    B, Sx, in_x = x.shape
    By, Sy, in_y = y.shape
    Dx, O, Dy = U.shape
    assert B == By
    assert Dx == in_x + int(bias_x) and Dy == in_y + int(bias_y)

    # --- Glue (done once in HBM by XLA, not per grid step) ------------------
    # Pad feature dims up to a multiple of 128; the bias "ones" column is
    # written into the pad region, the rest of the pad is zero (contributes 0
    # to the contractions).
    Dx_pad = _round_up(Dx, 128)
    Dy_pad = _round_up(Dy, 128)

    # Sx tiling (sublane dim of x / second-to-last dim of output block).
    Sx_t = min(_round_up(block_sx, 8), _round_up(Sx, 8))
    Sx_pad = _round_up(Sx, Sx_t)
    n_sx = Sx_pad // Sx_t

    x_p = jnp.pad(x, ((0, 0), (0, Sx_pad - Sx), (0, Dx_pad - in_x)))
    if bias_x:
        x_p = x_p.at[..., in_x].set(1.0)

    y_p = jnp.pad(y, ((0, 0), (0, 0), (0, Dy_pad - in_y)))
    if bias_y:
        y_p = y_p.at[..., in_y].set(1.0)
    yT_p = jnp.transpose(y_p, (0, 2, 1))                 # (B, Dy_pad, Sy)

    # U[i, o, j] -> U_t[o, i, j], zero-padded on both contraction axes.
    U_t = jnp.transpose(U, (1, 0, 2))                    # (O, Dx, Dy)
    U_t = jnp.pad(U_t, ((0, 0), (0, Dx_pad - Dx), (0, Dy_pad - Dy)))

    x_p = x_p.astype(compute_dtype)
    yT_p = yT_p.astype(compute_dtype)
    U_t = U_t.astype(compute_dtype)

    kernel = functools.partial(_biaffine_kernel, compute_dtype=compute_dtype)

    out_boxy = pl.pallas_call(
        kernel,
        out_shape=jax.ShapeDtypeStruct((B, O, Sx_pad, Sy), jnp.float32),
        grid_spec=pltpu.PrefetchScalarGridSpec(
            num_scalar_prefetch=0,
            grid=(B, O, n_sx),
            in_specs=[
                # x tile: depends on (b, sx-tile)
                pl.BlockSpec((1, Sx_t, Dx_pad), lambda b, o, s: (b, s, 0)),
                # pre-transposed y: depends on b only
                pl.BlockSpec((1, Dy_pad, Sy), lambda b, o, s: (b, 0, 0)),
                # per-channel (D, D) slice of U: depends on o only
                pl.BlockSpec((1, Dx_pad, Dy_pad), lambda b, o, s: (o, 0, 0)),
            ],
            out_specs=pl.BlockSpec((1, 1, Sx_t, Sy),
                                   lambda b, o, s: (b, o, s, 0)),
        ),
        compiler_params=pltpu.CompilerParams(
            dimension_semantics=("parallel", "parallel", "parallel")),
    )(x_p, yT_p, U_t)

    # Kernel layout (B, O, Sx, Sy) -> PyTorch layout (B, Sx, Sy, O); drop Sx pad.
    # TODO(synk): skip this transpose if downstream can consume (B, O, Sx, Sy).
    return jnp.transpose(out_boxy, (0, 2, 3, 1))[:, :Sx]


if __name__ == "__main__":
    # Small, deterministic example: batch=2, seq=8, hidden=32, out=4.
    B, Sx, Sy, IN, OUT = 2, 8, 8, 32, 4
    key = jax.random.PRNGKey(0)
    kx, ky, ku = jax.random.split(key, 3)

    x = jax.random.normal(kx, (B, Sx, IN), dtype=jnp.float32)
    y = jax.random.normal(ky, (B, Sy, IN), dtype=jnp.float32)
    # Deterministic stand-in for torch.randn(in+1, out, in+1).
    U = jax.random.normal(ku, (IN + 1, OUT, IN + 1), dtype=jnp.float32)

    out = biaffine_forward(x, y, U, bias_x=True, bias_y=True)
    out = jax.block_until_ready(out)
    assert out.shape == (B, Sx, Sy, OUT)

    # ---- Reference checks ---------------------------------------------------
    x_aug = jnp.concatenate([x, jnp.ones_like(x[..., :1])], axis=-1)
    y_aug = jnp.concatenate([y, jnp.ones_like(y[..., :1])], axis=-1)

    # (1) Tight check against a reference that mirrors the kernel's bf16-operand /
    #     f32-accumulate two-stage computation.
    xb = x_aug.astype(jnp.bfloat16)
    yb = y_aug.astype(jnp.bfloat16)
    ub = U.astype(jnp.bfloat16)
    t_ref = jnp.einsum('bxi,ioj->bxoj', xb, ub,
                       preferred_element_type=jnp.float32)
    ref_bf16 = jnp.einsum('bxoj,byj->bxyo', t_ref.astype(jnp.bfloat16), yb,
                          preferred_element_type=jnp.float32)
    assert jnp.allclose(out, ref_bf16, atol=2e-2, rtol=1e-3), (
        float(jnp.max(jnp.abs(out - ref_bf16))))

    # (2) Loose semantic check against the pure-f32 einsum (torch.einsum analog);
    #     tolerance accounts for the bf16 MXU operands.
    ref_f32 = jnp.einsum('bxi,ioj,byj->bxyo', x_aug, U, y_aug)
    err = float(jnp.max(jnp.abs(out - ref_f32)))
    scale = float(jnp.max(jnp.abs(ref_f32)))
    assert err <= 5e-2 * scale + 0.1, (err, scale)

    print("KERNEL_OK")
</pallas_src>

<mosaic_0001>
module attributes {stable_mosaic.version = 11 : i64} {
  func.func @_biaffine_kernel(%arg0: i32, %arg1: i32, %arg2: i32, %arg3: memref<1x8x128xbf16, #tpu.memory_space<vmem>>, %arg4: memref<1x128x8xbf16, #tpu.memory_space<vmem>>, %arg5: memref<1x128x128xbf16, #tpu.memory_space<vmem>>, %arg6: memref<1x1x8x8xf32, #tpu.memory_space<vmem>>) attributes {dimension_semantics = [#tpu.dimension_semantics<parallel>, #tpu.dimension_semantics<parallel>, #tpu.dimension_semantics<parallel>], iteration_bounds = array<i64: 2, 4, 1>, scalar_prefetch = 0 : i64, scratch_operands = 0 : i64, tpu.core_type = #tpu.core_type<tc>, window_params = [{transform_indices = @transform_0, window_bounds = array<i64: 1, 8, 128>}, {transform_indices = @transform_1, window_bounds = array<i64: 1, 128, 8>}, {transform_indices = @transform_2, window_bounds = array<i64: 1, 128, 128>}, {transform_indices = @transform_3, window_bounds = array<i64: 1, 1, 8, 8>}]} {
    %c0 = arith.constant 0 : index
    %c0_0 = arith.constant 0 : index
    %c0_1 = arith.constant 0 : index
    %0 = vector.load %arg3[%c0, %c0_0, %c0_1] : memref<1x8x128xbf16, #tpu.memory_space<vmem>>, vector<1x8x128xbf16>
    %1 = vector.shape_cast %0 : vector<1x8x128xbf16> to vector<8x128xbf16>
    %c0_2 = arith.constant 0 : index
    %c0_3 = arith.constant 0 : index
    %c0_4 = arith.constant 0 : index
    %2 = vector.load %arg4[%c0_2, %c0_3, %c0_4] : memref<1x128x8xbf16, #tpu.memory_space<vmem>>, vector<1x128x8xbf16>
    %3 = vector.shape_cast %2 : vector<1x128x8xbf16> to vector<128x8xbf16>
    %c0_5 = arith.constant 0 : index
    %c0_6 = arith.constant 0 : index
    %c0_7 = arith.constant 0 : index
    %4 = vector.load %arg5[%c0_5, %c0_6, %c0_7] : memref<1x128x128xbf16, #tpu.memory_space<vmem>>, vector<1x128x128xbf16>
    %5 = vector.shape_cast %4 : vector<1x128x128xbf16> to vector<128x128xbf16>
    %cst = arith.constant dense<0.000000e+00> : vector<8x128xf32>
    %6 = tpu.matmul %1, %5, %cst {dimension_numbers = #tpu.dot_dimension_numbers<[1], [0], [0], [1], [0, 0, 1, 1], [], []>} : vector<8x128xbf16>, vector<128x128xbf16>, vector<8x128xf32> -> vector<8x128xf32>
    %7 = arith.truncf %6 : vector<8x128xf32> to vector<8x128xbf16>
    %cst_8 = arith.constant dense<0.000000e+00> : vector<8x8xf32>
    %8 = tpu.matmul %7, %3, %cst_8 {dimension_numbers = #tpu.dot_dimension_numbers<[1], [0], [0], [1], [0, 0, 1, 1], [], []>} : vector<8x128xbf16>, vector<128x8xbf16>, vector<8x8xf32> -> vector<8x8xf32>
    %c0_9 = arith.constant 0 : index
    %c0_10 = arith.constant 0 : index
    %c0_11 = arith.constant 0 : index
    %c0_12 = arith.constant 0 : index
    %9 = vector.load %arg6[%c0_9, %c0_10, %c0_11, %c0_12] : memref<1x1x8x8xf32, #tpu.memory_space<vmem>>, vector<1x1x8x8xf32>
    %10 = vector.shape_cast %9 : vector<1x1x8x8xf32> to vector<8x8xf32>
    %11 = vector.shape_cast %8 : vector<8x8xf32> to vector<1x1x8x8xf32>
    tpu.vector_store %arg6[%c0_9, %c0_10, %c0_11, %c0_12], %11 {strides = array<i32>} : memref<1x1x8x8xf32, #tpu.memory_space<vmem>>, vector<1x1x8x8xf32>,
    return
  }
  func.func @transform_0(%arg0: i32, %arg1: i32, %arg2: i32) -> (i32, i32, i32) {
    %c0_i32 = arith.constant 0 : i32
    %c0_i32_0 = arith.constant 0 : i32
    return %arg0, %arg2, %c0_i32 : i32, i32, i32
  }
  func.func @transform_1(%arg0: i32, %arg1: i32, %arg2: i32) -> (i32, i32, i32) {
    %c0_i32 = arith.constant 0 : i32
    %c0_i32_0 = arith.constant 0 : i32
    %c0_i32_1 = arith.constant 0 : i32
    return %arg0, %c0_i32, %c0_i32_0 : i32, i32, i32
  }
  func.func @transform_2(%arg0: i32, %arg1: i32, %arg2: i32) -> (i32, i32, i32) {
    %c0_i32 = arith.constant 0 : i32
    %c0_i32_0 = arith.constant 0 : i32
    %c0_i32_1 = arith.constant 0 : i32
    return %arg1, %c0_i32, %c0_i32_0 : i32, i32, i32
  }
  func.func @transform_3(%arg0: i32, %arg1: i32, %arg2: i32) -> (i32, i32, i32, i32) {
    %c0_i32 = arith.constant 0 : i32
    %c0_i32_0 = arith.constant 0 : i32
    return %arg0, %arg1, %arg2, %c0_i32 : i32, i32, i32, i32
  }
}

</mosaic_0001>

<llo_original>
// kernel: tpu_custom_call.1
$region0: #{tpu_custom_call.1}
  #allocation0 [shape = 'u32[]', space=smem, size = 0x4, offset = 0x4, fixed_abs, tag = 'smem constant byte address 0x4 - core index']
  #allocation1 [shape = 'u32[144,128]{1,0:T(1,128)}', space=vmem, size = 0x12000, scoped, tag = 'internal scratch']
  %s0 = inlined_call_operand.vmem [shape: bf16[2,8,128], index: 0, kind: input, shape index: {}]
  %s1 = inlined_call_operand.vmem [shape: bf16[2,128,8], index: 1, kind: input, shape index: {}]
  %s2 = inlined_call_operand.hbm [shape: bf16[4,128,128], index: 2, kind: input, shape index: {}]
  %s3 = inlined_call_operand.hbm [shape: f32[2,4,8,8], index: 3, kind: output, shape index: {}]
  %s4 = sld [smem:[#allocation0]]
  $region49: #{tpu_custom_call.1} parent=0
    _
  %s6 = ssub.s32 1, %s4
  %s7 = scalar_select 0, %s6, %s4
  $region1: #{tpu_custom_call.1} parent=0
    #allocation2 [shape = 'u8[65536]{0}', space=vmem, size = 0x10000, scoped, tag = 'input window, operand 2']
    #allocation3 [shape = 's32[2]{0}', space=sflag, size = 0x8, scoped, tag = 'scoped memory for tpu_custom_call.1']
    #allocation4 [shape = 's32[2]{0}', space=sflag, size = 0x8, scoped, tag = 'scoped memory for tpu_custom_call.1']
    #allocation5 [shape = 'u8[8192]{0}', space=vmem, size = 0x2000, scoped, tag = 'output window, operand 0']
    %8 = vsyncpa [#allocation3], 0
    %s9 = scalar_lea.sflag [#allocation3], 1
    %10 = vsyncpa %s9, 0
    %11 = vsyncpa [#allocation4], 0
    %s12 = scalar_lea.sflag [#allocation4], 1
    %13 = vsyncpa %s12, 0
    loop: start=0, step=1, limit=10
    $region2: #{tpu_custom_call.1} parent=1 // loop_pre_header
      _
    $region3: #{tpu_custom_call.1} parent=1 // loop_header
      %s15 = sphi 0, %s19
      %p16 = scmp.ge.s32.totalorder %s15, 10
      %s22 = sphi 0, %s41
      %s23 = sphi 0, %s37
      %s24 = sphi 0, %s33
      %s25 = sphi 0, %s22
      %s26 = sphi 0, %s23
      %s27 = sphi 0, %s24
      %s28 = sphi 0, %s25
      %s29 = sphi 0, %s26
      %s30 = sphi 0, %s27
      %s46 = sphi 0, %s48
      %s49 = sphi 0, %s46
      %s50 = sphi 0, %s49
      %s66 = sphi 0, %s50
      %s72 = sphi 0, %s74
      %s75 = sphi 0, %s72
      %s76 = sphi 0, %s75
      %s92 = sphi 0, %s76
      %s98 = sphi 0, %s100
      %s101 = sphi 0, %s98
      %s102 = sphi 0, %s101
      %s118 = sphi 0, %s102
      %s128 = sphi 0, %s130
      %s131 = sphi 0, %s128
      %s132 = sphi 0, %s131
      %s148 = sphi 0, %s132
    $region4: #{tpu_custom_call.1} parent=1 // loop_header_branch
      %18 = sbr.rel (%p16) target = $region8
    $region5: #{tpu_custom_call.1} parent=1 // loop_body
      %s20 = ssub.s32 %s15, 1
      %s21 = ssub.s32 %s15, 2
      %s31 = sadd.s32 1, %s24
      %p32 = scmp.ge.s32.totalorder %s31, 1
      %s33 = scalar_select %p32, 0, %s31
      %s34 = sadd.s32 1, %s23
      %s35 = scalar_select %p32, %s34, %s23
      %p36 = scmp.ge.s32.totalorder %s35, 4
      %s37 = scalar_select %p36, 0, %s35
      %s38 = sadd.s32 1, %s22
      %s39 = scalar_select %p36, %s38, %s22
      %p40 = scmp.ge.s32.totalorder %s39, 2
      %s41 = scalar_select %p40, 0, %s39
      %s42 = ssub.s32 %s22, %s41
      %s43 = ssub.s32 %s24, %s33
      %s44 = sor.u32 %s42, %s43
      %p45 = scmp.eq.s32.totalorder %s44, 0
      %s47 = sadd.s32 %s46, 1
      %s48 = scalar_select %p45, %s46, %s47
      %p51 = pneg %p45
      %p52 = scmp.eq.s32.totalorder %s15, 7
      %p53 = por %p51, %p52
      %p54 = scmp.ne.s32.totalorder %s46, %s49
      %p55 = scmp.eq.s32.totalorder %s15, 0
      %p56 = por %p54, %p55
      %p57 = scmp.ne.s32.totalorder %s46, %s49
      %p58 = scmp.eq.s32.totalorder %s20, 7
      %p59 = por %p57, %p58
      %p60 = scmp.ne.s32.totalorder %s49, %s50
      %p61 = scmp.eq.s32.totalorder %s20, 0
      %p62 = por %p60, %p61
      %p63 = scmp.ne.s32.totalorder %s49, %s50
      %p64 = scmp.eq.s32.totalorder %s21, 7
      %p65 = por %p63, %p64
      %p67 = scmp.ne.s32.totalorder %s50, %s66
      %p68 = scmp.eq.s32.totalorder %s21, 0
      %p69 = por %p67, %p68
      %s70 = ssub.s32 %s22, %s41
      %p71 = scmp.eq.s32.totalorder %s70, 0
      %s73 = sadd.s32 %s72, 1
      %s74 = scalar_select %p71, %s72, %s73
      %p77 = pneg %p71
      %p78 = scmp.eq.s32.totalorder %s15, 7
      %p79 = por %p77, %p78
      %p80 = scmp.ne.s32.totalorder %s72, %s75
      %p81 = scmp.eq.s32.totalorder %s15, 0
      %p82 = por %p80, %p81
      %p83 = scmp.ne.s32.totalorder %s72, %s75
      %p84 = scmp.eq.s32.totalorder %s20, 7
      %p85 = por %p83, %p84
      %p86 = scmp.ne.s32.totalorder %s75, %s76
      %p87 = scmp.eq.s32.totalorder %s20, 0
      %p88 = por %p86, %p87
      %p89 = scmp.ne.s32.totalorder %s75, %s76
      %p90 = scmp.eq.s32.totalorder %s21, 7
      %p91 = por %p89, %p90
      %p93 = scmp.ne.s32.totalorder %s76, %s92
      %p94 = scmp.eq.s32.totalorder %s21, 0
      %p95 = por %p93, %p94
      %s96 = ssub.s32 %s23, %s37
      %p97 = scmp.eq.s32.totalorder %s96, 0
      %s99 = sadd.s32 %s98, 1
      %s100 = scalar_select %p97, %s98, %s99
      %p103 = pneg %p97
      %p104 = scmp.eq.s32.totalorder %s15, 7
      %p105 = por %p103, %p104
      %p106 = scmp.ne.s32.totalorder %s98, %s101
      %p107 = scmp.eq.s32.totalorder %s15, 0
      %p108 = por %p106, %p107
      %p109 = scmp.ne.s32.totalorder %s98, %s101
      %p110 = scmp.eq.s32.totalorder %s20, 7
      %p111 = por %p109, %p110
      %p112 = scmp.ne.s32.totalorder %s101, %s102
      %p113 = scmp.eq.s32.totalorder %s20, 0
      %p114 = por %p112, %p113
      %p115 = scmp.ne.s32.totalorder %s101, %s102
      %p116 = scmp.eq.s32.totalorder %s21, 7
      %p117 = por %p115, %p116
      %p119 = scmp.ne.s32.totalorder %s102, %s118
      %p120 = scmp.eq.s32.totalorder %s21, 0
      %p121 = por %p119, %p120
      %s122 = ssub.s32 %s22, %s41
      %s123 = ssub.s32 %s23, %s37
      %s124 = sor.u32 %s122, %s123
      %s125 = ssub.s32 %s24, %s33
      %s126 = sor.u32 %s124, %s125
      %p127 = scmp.eq.s32.totalorder %s126, 0
      %s129 = sadd.s32 %s128, 1
      %s130 = scalar_select %p127, %s128, %s129
      %p133 = pneg %p127
      %p134 = scmp.eq.s32.totalorder %s15, 7
      %p135 = por %p133, %p134
      %p136 = scmp.ne.s32.totalorder %s128, %s131
      %p137 = scmp.eq.s32.totalorder %s15, 0
      %p138 = por %p136, %p137
      %p139 = scmp.ne.s32.totalorder %s128, %s131
      %p140 = scmp.eq.s32.totalorder %s20, 7
      %p141 = por %p139, %p140
      %p142 = scmp.ne.s32.totalorder %s131, %s132
      %p143 = scmp.eq.s32.totalorder %s20, 0
      %p144 = por %p142, %p143
      %p145 = scmp.ne.s32.totalorder %s131, %s132
      %p146 = scmp.eq.s32.totalorder %s21, 7
      %p147 = por %p145, %p146
      %p149 = scmp.ne.s32.totalorder %s132, %s148
      %p150 = scmp.eq.s32.totalorder %s21, 0
      %p151 = por %p149, %p150
      %p152 = scmp.le.s32.totalorder 1, %s15
      %p153 = scmp.lt.s32.totalorder %s15, 9
      %p154 = pnand %p152, %p153
      %p155 = pneg %p154
      // Predicated region
      $region9: #{tpu_custom_call.1} parent=5 // pred_check
        _
      $region10: #{tpu_custom_call.1} parent=5 // pred_check_branch
        %157 = sbr.rel (%p154) target = $region12
      $region11: #{tpu_custom_call.1} parent=5 // pred_region
        %s158 = ssub.s32 %s15, 1
      $region12: #{tpu_custom_call.1} parent=5 // pred_fallthru
        _
      %p159 = scmp.lt.s32.totalorder %s15, 8
      // Predicated region
      $region13: #{tpu_custom_call.1} parent=5 // pred_check
        %p160 = pneg %p159
      $region14: #{tpu_custom_call.1} parent=5 // pred_check_branch
        %162 = sbr.rel (%p160) target = $region16
      $region15: #{tpu_custom_call.1} parent=5 // pred_region
        // Predicated region
        $region17: #{tpu_custom_call.1} parent=15 // pred_check
          %p163 = pneg %p56
        $region18: #{tpu_custom_call.1} parent=15 // pred_check_branch
          %165 = sbr.rel (%p163) target = $region20
        $region19: #{tpu_custom_call.1} parent=15 // pred_region
          %p166 = scmp.lt.s32.totalorder %s22, 1
          %s167 = scalar_select %p166, %s22, 1
          %p168 = scmp.lt.s32.totalorder %s24, 0
          %s169 = scalar_select %p168, %s24, 0
          %s170 = sadd.s32 %s169, %s167
          %s171 = smul.addr %s170, 4
          %s172 = scalar_lea.vmem %s0, %s171
        $region20: #{tpu_custom_call.1} parent=15 // pred_fallthru
          _
        // Predicated region
        $region21: #{tpu_custom_call.1} parent=15 // pred_check
          %p173 = pneg %p82
        $region22: #{tpu_custom_call.1} parent=15 // pred_check_branch
          %175 = sbr.rel (%p173) target = $region24
        $region23: #{tpu_custom_call.1} parent=15 // pred_region
          %p176 = scmp.lt.s32.totalorder %s22, 1
          %s177 = scalar_select %p176, %s22, 1
          %s178 = smul.addr %s177, 16
          %s179 = smul.addr %s178, 4
          %s180 = scalar_lea.vmem %s1, %s179
        $region24: #{tpu_custom_call.1} parent=15 // pred_fallthru
          _
        // Predicated region
        $region25: #{tpu_custom_call.1} parent=15 // pred_check
          %p181 = pneg %p108
        $region26: #{tpu_custom_call.1} parent=15 // pred_check_branch
          %183 = sbr.rel (%p181) target = $region28
        $region27: #{tpu_custom_call.1} parent=15 // pred_region
          %s184 = sand.u32 %s98, 1
          %s185 = scalar_lea.sflag [#allocation3], %s184
          %s186 = sand.u32 %s98, 1
          %s187 = smul.addr %s186, 64
          %s188 = scalar_lea.vmem [#allocation2], %s187
          %s190 = ssub.s32 1024, 1024
          %191 = vsyncadd %s185, %s190
          %s192 = smul.addr %s23, 16
          %s193 = smul.addr %s192, 64
          %s194 = scalar_lea.hbm %s2, %s193
          %s195 = sshll.u32 %s188, 4
          %s196 = int_to_ptr.vmem [resolvable:$true] %s195
          %201 = dma.hbm_to_vmem [thread:$0]  %s194, 1024, %s196, %s185, 64, 64, 4
        $region28: #{tpu_custom_call.1} parent=15 // pred_fallthru
          _
      $region16: #{tpu_custom_call.1} parent=5 // pred_fallthru
        _
      %p202 = scmp.le.s32.totalorder 1, %s15
      %p203 = scmp.lt.s32.totalorder %s15, 9
      %p204 = pnand %p202, %p203
      %p205 = pneg %p204
      // Predicated region
      $region29: #{tpu_custom_call.1} parent=5 // pred_check
        _
      $region30: #{tpu_custom_call.1} parent=5 // pred_check_branch
        %207 = sbr.rel (%p204) target = $region32
      $region31: #{tpu_custom_call.1} parent=5 // pred_region
        %s208 = ssub.s32 %s15, 1
        %s209 = sand.u32 %s101, 1
        %s210 = scalar_lea.sflag [#allocation3], %s209
        %s211 = sand.u32 %s101, 1
        %s212 = smul.addr %s211, 64
        %s213 = scalar_lea.vmem [#allocation2], %s212
        // Predicated region
        $region33: #{tpu_custom_call.1} parent=31 // pred_check
          %p214 = pneg %p114
        $region34: #{tpu_custom_call.1} parent=31 // pred_check_branch
          %216 = sbr.rel (%p214) target = $region36
        $region35: #{tpu_custom_call.1} parent=31 // pred_region
          %217 = dma.done %s210, 1024
        $region36: #{tpu_custom_call.1} parent=31 // pred_fallthru
          _
        %p218 = scmp.lt.s32.totalorder %s25, 1
        %s219 = scalar_select %p218, %s25, 1
        %p220 = scmp.lt.s32.totalorder %s27, 0
        %s221 = scalar_select %p220, %s27, 0
        %s222 = sadd.s32 %s221, %s219
        %s223 = smul.addr %s222, 4
        %s224 = scalar_lea.vmem %s0, %s223
        %p225 = pneg %p62
        %p226 = pneg %p59
        %p227 = scmp.lt.s32.totalorder %s25, 1
        %s228 = scalar_select %p227, %s25, 1
        %s229 = smul.addr %s228, 16
        %s230 = smul.addr %s229, 4
        %s231 = scalar_lea.vmem %s1, %s230
        %p232 = pneg %p88
        %p233 = pneg %p85
        %s234 = sand.u32 %s101, 1
        %s235 = scalar_lea.sflag [#allocation3], %s234
        %s236 = sand.u32 %s101, 1
        %s237 = smul.addr %s236, 64
        %s238 = scalar_lea.vmem [#allocation2], %s237
        %p239 = pneg %p114
        %p240 = pneg %p111
        %p241 = pneg %p144
        %p242 = pneg %p141
        %s243 = sand.u32 %s131, 1
        %s244 = scalar_lea.sflag [#allocation4], %s243
        %s245 = sand.u32 %s131, 1
        %s246 = smul.addr %s245, 8
        %s247 = scalar_lea.vmem [#allocation5], %s246
        %p248 = scmp.lt.s32.totalorder %s25, 1
        %s249 = scalar_select %p248, %s25, 1
        %p250 = scmp.lt.s32.totalorder %s27, 0
        %s251 = scalar_select %p250, %s27, 0
        %s252 = sadd.s32 %s251, %s249
        %s253 = smul.addr %s252, 4
        %s254 = scalar_lea.vmem %s0, %s253
        %p255 = scmp.lt.s32.totalorder %s25, 1
        %s256 = scalar_select %p255, %s25, 1
        %s257 = smul.addr %s256, 16
        %s258 = smul.addr %s257, 4
        %s259 = scalar_lea.vmem %s1, %s258
        %v261 = vld [vmem:[%s254] sm:$0xf]
        %v262 = vld [vmem:[%s259] sm:$0xf]
        %v263 = vld [vmem:[%s259 + $0x4] sm:$0xf]
        %v264 = vld [vmem:[%s259 + $0x8] sm:$0xf]
        %v265 = vld [vmem:[%s259 + $0xc] sm:$0xf]
        %v266 = vld [vmem:[%s259 + $0x10] sm:$0xf]
        %v267 = vld [vmem:[%s259 + $0x14] sm:$0xf]
        %v268 = vld [vmem:[%s259 + $0x18] sm:$0xf]
        %v269 = vld [vmem:[%s259 + $0x1c] sm:$0xf]
        %v270 = vld [vmem:[%s259 + $0x20] sm:$0xf]
        %v271 = vld [vmem:[%s259 + $0x24] sm:$0xf]
        %v272 = vld [vmem:[%s259 + $0x28] sm:$0xf]
        %v273 = vld [vmem:[%s259 + $0x2c] sm:$0xf]
        %v274 = vld [vmem:[%s259 + $0x30] sm:$0xf]
        %v275 = vld [vmem:[%s259 + $0x34] sm:$0xf]
        %v276 = vld [vmem:[%s259 + $0x38] sm:$0xf]
        %v277 = vld [vmem:[%s259 + $0x3c] sm:$0xf]
        %v278 = vld [vmem:[%s213] sm:$0xf]
        %v279 = vld [vmem:[%s213 + $0x4] sm:$0xf]
        %v280 = vld [vmem:[%s213 + $0x8] sm:$0xf]
        %v281 = vld [vmem:[%s213 + $0xc] sm:$0xf]
        %v282 = vld [vmem:[%s213 + $0x10] sm:$0xf]
        %v283 = vld [vmem:[%s213 + $0x14] sm:$0xf]
        %v284 = vld [vmem:[%s213 + $0x18] sm:$0xf]
        %v285 = vld [vmem:[%s213 + $0x1c] sm:$0xf]
        %v286 = vld [vmem:[%s213 + $0x20] sm:$0xf]
        %v287 = vld [vmem:[%s213 + $0x24] sm:$0xf]
        %v288 = vld [vmem:[%s213 + $0x28] sm:$0xf]
        %v289 = vld [vmem:[%s213 + $0x2c] sm:$0xf]
        %v290 = vld [vmem:[%s213 + $0x30] sm:$0xf]
        %v291 = vld [vmem:[%s213 + $0x34] sm:$0xf]
        %v292 = vld [vmem:[%s213 + $0x38] sm:$0xf]
        %v293 = vld [vmem:[%s213 + $0x3c] sm:$0xf]
        %v310 = vunpack.c.l.b16 %v278
        %v311 = vunpack.c.l.b16 %v279
        %v312 = vunpack.c.l.b16 %v280
        %v313 = vunpack.c.l.b16 %v281
        %v314 = vunpack.c.l.b16 %v282
        %v315 = vunpack.c.l.b16 %v283
        %v316 = vunpack.c.l.b16 %v284
        %v317 = vunpack.c.l.b16 %v285
        %v318 = vunpack.c.l.b16 %v286
        %v319 = vunpack.c.l.b16 %v287
        %v320 = vunpack.c.l.b16 %v288
        %v321 = vunpack.c.l.b16 %v289
        %v322 = vunpack.c.l.b16 %v290
        %v323 = vunpack.c.l.b16 %v291
        %v324 = vunpack.c.l.b16 %v292
        %v325 = vunpack.c.l.b16 %v293
        %v326 = vpack.c.b16 %v311, %v310
        %v327 = vpack.c.b16 %v313, %v312
        %v328 = vpack.c.b16 %v315, %v314
        %v329 = vpack.c.b16 %v317, %v316
        %v330 = vpack.c.b16 %v319, %v318
        %v331 = vpack.c.b16 %v321, %v320
        %v332 = vpack.c.b16 %v323, %v322
        %v333 = vpack.c.b16 %v325, %v324
        %342 = vmatprep.subr.bf16.mxu0 0
        %343 = vmatpush1.bf16.msra.mxu0 %v326
        %344 = vmatprep.subr.bf16.mxu0 0
        %345 = vmatpush1.bf16.msra.mxu0 %v327
        %346 = vmatprep.subr.bf16.mxu0 0
        %347 = vmatpush1.bf16.msra.mxu0 %v328
        %348 = vmatprep.subr.bf16.mxu0 0
        %349 = vmatpush1.bf16.msra.mxu0 %v329
        %350 = vmatprep.subr.bf16.mxu0 0
        %351 = vmatpush1.bf16.msra.mxu0 %v330
        %352 = vmatprep.subr.bf16.mxu0 0
        %353 = vmatpush1.bf16.msra.mxu0 %v331
        %354 = vmatprep.subr.bf16.mxu0 0
        %355 = vmatpush1.bf16.msra.mxu0 %v332
        %356 = vmatprep.subr.bf16.mxu0 0
        %357 = vmatpush1.bf16.msra.mxu0 %v333
        %358 = vmatprep.subr.bf16.mxu0 0
        %359 = vmatpush1.bf16.msra.mxu0 0
        %360 = vmatprep.subr.bf16.mxu0 0
        %361 = vmatpush1.bf16.msra.mxu0 0
        %362 = vmatprep.subr.bf16.mxu0 0
        %363 = vmatpush1.bf16.msra.mxu0 0
        %364 = vmatprep.subr.bf16.mxu0 0
        %365 = vmatpush1.bf16.msra.mxu0 0
        %366 = vmatprep.subr.bf16.mxu0 0
        %367 = vmatpush1.bf16.msra.mxu0 0
        %368 = vmatprep.subr.bf16.mxu0 0
        %369 = vmatpush1.bf16.msra.mxu0 0
        %370 = vmatprep.subr.bf16.mxu0 0
        %371 = vmatpush1.bf16.msra.mxu0 0
        %372 = vmatprep.subr.bf16.mxu0 0
        %373 = vmatpush1.bf16.msra.mxu0 0
        %374 = vmatprep.mubr.bf16.mxu0 0
        %375 = vmatmul.mubr.bf16.gmra.mrb[0].mxu0 %v261
        %v376 = vpop.f32.mrb[0].mxu0
        %v377 = vadd.f32 0.0, %v376
        %v378 = vpop.f32.mrb[0].mxu0
        %v379 = vpop.f32.mrb[0].mxu0
        %v380 = vpop.f32.mrb[0].mxu0
        %381 = vdwg.mxu0
        %v382 = vpack.c.bf16 %v377, %v377
        %v399 = vunpack.c.l.b16 %v262
        %v400 = vunpack.c.l.b16 %v263
        %v401 = vunpack.c.l.b16 %v264
        %v402 = vunpack.c.l.b16 %v265
        %v403 = vunpack.c.l.b16 %v266
        %v404 = vunpack.c.l.b16 %v267
        %v405 = vunpack.c.l.b16 %v268
        %v406 = vunpack.c.l.b16 %v269
        %v407 = vunpack.c.l.b16 %v270
        %v408 = vunpack.c.l.b16 %v271
        %v409 = vunpack.c.l.b16 %v272
        %v410 = vunpack.c.l.b16 %v273
        %v411 = vunpack.c.l.b16 %v274
        %v412 = vunpack.c.l.b16 %v275
        %v413 = vunpack.c.l.b16 %v276
        %v414 = vunpack.c.l.b16 %v277
        %v415 = vpack.c.b16 %v400, %v399
        %v416 = vpack.c.b16 %v402, %v401
        %v417 = vpack.c.b16 %v404, %v403
        %v418 = vpack.c.b16 %v406, %v405
        %v419 = vpack.c.b16 %v408, %v407
        %v420 = vpack.c.b16 %v410, %v409
        %v421 = vpack.c.b16 %v412, %v411
        %v422 = vpack.c.b16 %v414, %v413
        %431 = vmatprep.subr.bf16.mxu0 0
        %432 = vmatpush1.bf16.msra.mxu0 %v415
        %433 = vmatprep.subr.bf16.mxu0 0
        %434 = vmatpush1.bf16.msra.mxu0 %v416
        %435 = vmatprep.subr.bf16.mxu0 0
        %436 = vmatpush1.bf16.msra.mxu0 %v417
        %437 = vmatprep.subr.bf16.mxu0 0
        %438 = vmatpush1.bf16.msra.mxu0 %v418
        %439 = vmatprep.subr.bf16.mxu0 0
        %440 = vmatpush1.bf16.msra.mxu0 %v419
        %441 = vmatprep.subr.bf16.mxu0 0
        %442 = vmatpush1.bf16.msra.mxu0 %v420
        %443 = vmatprep.subr.bf16.mxu0 0
        %444 = vmatpush1.bf16.msra.mxu0 %v421
        %445 = vmatprep.subr.bf16.mxu0 0
        %446 = vmatpush1.bf16.msra.mxu0 %v422
        %447 = vmatprep.subr.bf16.mxu0 0
        %448 = vmatpush1.bf16.msra.mxu0 0
        %449 = vmatprep.subr.bf16.mxu0 0
        %450 = vmatpush1.bf16.msra.mxu0 0
        %451 = vmatprep.subr.bf16.mxu0 0
        %452 = vmatpush1.bf16.msra.mxu0 0
        %453 = vmatprep.subr.bf16.mxu0 0
        %454 = vmatpush1.bf16.msra.mxu0 0
        %455 = vmatprep.subr.bf16.mxu0 0
        %456 = vmatpush1.bf16.msra.mxu0 0
        %457 = vmatprep.subr.bf16.mxu0 0
        %458 = vmatpush1.bf16.msra.mxu0 0
        %459 = vmatprep.subr.bf16.mxu0 0
        %460 = vmatpush1.bf16.msra.mxu0 0
        %461 = vmatprep.subr.bf16.mxu0 0
        %462 = vmatpush1.bf16.msra.mxu0 0
        %463 = vmatprep.mubr.bf16.mxu0 0
        %464 = vmatmul.mubr.bf16.gmra.mrb[0].mxu0 %v382
        %v465 = vpop.f32.mrb[0].mxu0
        %v466 = vadd.f32 0.0, %v465
        %v467 = vpop.f32.mrb[0].mxu0
        %v468 = vpop.f32.mrb[0].mxu0
        %v469 = vpop.f32.mrb[0].mxu0
        %470 = vdwg.mxu0
        %vm471 = vcmask 64512
        %472 = vst.msk [vmem:[%s247] sm:$0xff] %vm471, %v466
        %s473 = sand.u32 %s131, 1
        %s474 = scalar_lea.sflag [#allocation4], %s473
        %s475 = sand.u32 %s131, 1
        %s476 = smul.addr %s475, 8
        %s477 = scalar_lea.vmem [#allocation5], %s476
        // Predicated region
        $region37: #{tpu_custom_call.1} parent=31 // pred_check
          %p478 = pneg %p141
        $region38: #{tpu_custom_call.1} parent=31 // pred_check_branch
          %480 = sbr.rel (%p478) target = $region40
        $region39: #{tpu_custom_call.1} parent=31 // pred_region
          %s482 = ssub.s32 128, 128
          %483 = vsyncadd %s474, %s482
          %s484 = sadd.s32 %s27, %s26
          %s485 = smul.addr %s25, 4
          %s486 = sadd.s32 %s484, %s485
          %s487 = smul.addr %s486, 128
          %s488 = scalar_lea.hbm %s3, %s487
          %s490 = sshll.u32 %s477, 4
          %s491 = int_to_ptr.vmem [resolvable:$true] %s490
          %493 = dma.vmem_to_hbm [thread:$0]  %s491, 128, %s488, %s474
        $region40: #{tpu_custom_call.1} parent=31 // pred_fallthru
          _
      $region32: #{tpu_custom_call.1} parent=5 // pred_fallthru
        _
      %p494 = scmp.le.s32.totalorder 2, %s15
      // Predicated region
      $region41: #{tpu_custom_call.1} parent=5 // pred_check
        %p495 = pneg %p494
      $region42: #{tpu_custom_call.1} parent=5 // pred_check_branch
        %497 = sbr.rel (%p495) target = $region44
      $region43: #{tpu_custom_call.1} parent=5 // pred_region
        %s498 = ssub.s32 %s15, 2
        // Predicated region
        $region45: #{tpu_custom_call.1} parent=43 // pred_check
          %p499 = pneg %p147
        $region46: #{tpu_custom_call.1} parent=43 // pred_check_branch
          %501 = sbr.rel (%p499) target = $region48
        $region47: #{tpu_custom_call.1} parent=43 // pred_region
          %s502 = sand.u32 %s132, 1
          %s503 = scalar_lea.sflag [#allocation4], %s502
          %s504 = sand.u32 %s132, 1
          %s505 = smul.addr %s504, 8
          %s506 = scalar_lea.vmem [#allocation5], %s505
          %507 = dma.done %s503, 128
        $region48: #{tpu_custom_call.1} parent=43 // pred_fallthru
          _
      $region44: #{tpu_custom_call.1} parent=5 // pred_fallthru
        _
    $region6: #{tpu_custom_call.1} parent=1 // loop_footer
      %s19 = sadd.s32 1, %s15
    $region7: #{tpu_custom_call.1} parent=1 // loop_footer_branch
      %14 = sbr.rel target = $region3
    $region8: #{tpu_custom_call.1} parent=1 // loop_exit
      _
    %508 = vsyncpa [#allocation3], 1
    %s509 = scalar_lea.sflag [#allocation3], 1
    %510 = vsyncpa %s509, 1
    %511 = vsyncpa [#allocation4], 1
    %s512 = scalar_lea.sflag [#allocation4], 1
    %513 = vsyncpa %s512, 1

</llo_original>
